<compile_context>
chip_gen: v5e
topology: v5e:2x2
jax: 0.10.0
libtpu: 0.0.40
codegen_flags: <defaults>
</compile_context>

<pallas_src>
import functools

import jax
import jax.numpy as jnp
from jax.experimental import pallas as pl
from jax.experimental.pallas import tpu as pltpu

_C1 = 0.01 ** 2
_C2 = 0.03 ** 2
_KW = 9  # AvgPool2d window along W

_VMEM_TILE_BUDGET = 24 * 1024 * 1024  # conservative: fits v7x's 64 MiB VMEM


def _cdiv(a, b):
    return (a + b - 1) // b


def _round_up(a, b):
    return _cdiv(a, b) * b


def _ssim_sparse_kernel(x_ref, y_ref, o_ref, *, use_roll):
    # x_ref, y_ref: (row_tile, W) ; o_ref: (row_tile, W - 8)
    x = x_ref[...].astype(jnp.float32)
    y = y_ref[...].astype(jnp.float32)
    W = x.shape[-1]
    Wo = o_ref.shape[-1]

    if use_roll:
        def wsum(a):
            # Log-tree sliding-window sum of width 9 via lane rotations: the
            # shifts ride the (otherwise idle) XLU slot. Lanes >= Wo contain
            # wrapped garbage and are sliced off at the final store.
            def left(v, k):
                return pltpu.roll(v, shift=(-k) % W, axis=1)
            s1 = a + left(a, 1)       # width-2 sums
            s2 = s1 + left(s1, 2)     # width-4 sums
            s4 = s2 + left(s2, 4)     # width-8 sums
            return s4 + left(a, 8)    # width-9 sums (full W, wrap in tail)
    else:
        def wsum(a):
            # Same log-tree using static lane-offset slices (W not a multiple
            # of 128, where a lane rotate is not guaranteed to lower cleanly).
            s1 = a[:, : W - 1] + a[:, 1:W]
            s2 = s1[:, : W - 3] + s1[:, 2 : W - 1]
            s4 = s2[:, : W - 7] + s2[:, 4 : W - 3]
            return s4[:, :Wo] + a[:, 8 : 8 + Wo]

    sx = wsum(x)
    sy = wsum(y)
    sxx = wsum(x * x)
    syy = wsum(y * y)
    sxy = wsum(x * y)

    # Work on raw window sums: mu = S/9. Folding the 1/9 (and 1/81) pooling
    # scales into the constants multiplies both n and d by 81**2, so the
    # ratio n/d (and hence the output) is unchanged.
    sx2 = sx * sx
    sy2 = sy * sy
    sxsy = sx * sy
    two_sxsy = 2.0 * sxsy
    c1s = float(_KW * _KW) * _C1
    c2s = float(_KW * _KW) * _C2

    n = (two_sxsy + c1s) * ((2.0 * _KW) * sxy - two_sxsy + c2s)
    d = (sx2 + sy2 + c1s) * (float(_KW) * (sxx + syy) - sx2 - sy2 + c2s)

    # d > 0 always (variances >= 0, constants > 0): safe for approx reciprocal.
    r = pl.reciprocal(d, approx=True)   # EUP slot (otherwise idle)
    r = r * (2.0 - d * r)               # one Newton step back to ~f32 accuracy
    out = jnp.clip((1.0 - n * r) * 0.5, 0.0, 1.0)
    o_ref[...] = out[:, :Wo].astype(o_ref.dtype)


def _choose_row_tile(rows, w, in_bytes):
    wo = w - (_KW - 1)
    # Per-row VMEM per grid step: double-buffered input blocks, double-buffered
    # output block, plus ~10 live f32 temporaries of width ~W in the body.
    per_row = 2 * (2 * w * in_bytes) + 2 * wo * 4 + 10 * w * 4
    tile = _VMEM_TILE_BUDGET // max(per_row, 1)
    tile = max(8, min(1024, (tile // 8) * 8))
    # Keep >= 4 grid steps when the problem is big enough so both v7x
    # TensorCores get work ("parallel" axis) and the DMA pipeline fills.
    if rows >= 4 * 8:
        tile = min(tile, _round_up(_cdiv(rows, 4), 8))
    return max(8, min(tile, _round_up(rows, 8)))


def _ssim_sparse_impl(x, y, *, row_tile=None, use_roll=False):
    assert x.shape == y.shape, "x and y must have the same shape"
    N, C, H, W = x.shape
    assert W > _KW - 1, "W must be > 8 for the (1, 9) pooling window"
    Wo = W - (_KW - 1)
    rows = N * C * H

    if row_tile is None:
        row_tile = _choose_row_tile(rows, W, jnp.dtype(x.dtype).itemsize)
    row_tile = max(8, (int(row_tile) // 8) * 8)
    row_tile = min(row_tile, _round_up(rows, 8))

    rows_p = _round_up(rows, row_tile)
    x2 = x.reshape(rows, W)
    y2 = y.reshape(rows, W)
    if rows_p != rows:
        # Pad rows so every shape stays on the tiled fast path (padding rows
        # produce finite values -- no NaNs -- and are sliced off the output).
        x2 = jnp.pad(x2, ((0, rows_p - rows), (0, 0)))
        y2 = jnp.pad(y2, ((0, rows_p - rows), (0, 0)))

    kernel = functools.partial(_ssim_sparse_kernel, use_roll=use_roll)
    out = pl.pallas_call(
        kernel,
        out_shape=jax.ShapeDtypeStruct((rows_p, Wo), x.dtype),
        grid_spec=pltpu.PrefetchScalarGridSpec(
            num_scalar_prefetch=0,
            grid=(rows_p // row_tile,),
            in_specs=[
                pl.BlockSpec((row_tile, W), lambda i: (i, 0)),
                pl.BlockSpec((row_tile, W), lambda i: (i, 0)),
            ],
            out_specs=pl.BlockSpec((row_tile, Wo), lambda i: (i, 0)),
        ),
        compiler_params=pltpu.CompilerParams(
            dimension_semantics=("parallel",),
            vmem_limit_bytes=32 * 1024 * 1024,
        ),
    )(x2, y2)

    if rows_p != rows:
        out = out[:rows]
    return out.reshape(N, C, H, Wo)


def _ssim_sparse_ref(x, y):
    """Pure-JAX reference mirroring the PyTorch module."""
    def pool(a):
        Wo = a.shape[-1] - (_KW - 1)
        return sum(a[..., k:k + Wo] for k in range(_KW)) / _KW

    mu_x = pool(x)
    mu_y = pool(y)
    sigma_x = pool(x * x) - mu_x ** 2
    sigma_y = pool(y * y) - mu_y ** 2
    sigma_xy = pool(x * y) - mu_x * mu_y
    n = (2 * mu_x * mu_y + _C1) * (2 * sigma_xy + _C2)
    d = (mu_x ** 2 + mu_y ** 2 + _C1) * (sigma_x + sigma_y + _C2)
    return jnp.clip((1 - n / d) / 2, 0.0, 1.0)


_ROLL_PATH_OK = None


def _roll_path_ok():
    """Probe (once) that the pltpu.roll log-tree lowers and matches the ref;
    otherwise silently fall back to the known-good slice-based tree."""
    global _ROLL_PATH_OK
    if _ROLL_PATH_OK is None:
        try:
            k0, k1 = jax.random.split(jax.random.PRNGKey(0))
            px = jax.random.uniform(k0, (1, 1, 8, 128), dtype=jnp.float32)
            py = jax.random.uniform(k1, (1, 1, 8, 128), dtype=jnp.float32)
            got = _ssim_sparse_impl(px, py, row_tile=8, use_roll=True)
            jax.block_until_ready(got)
            ref = _ssim_sparse_ref(px, py)
            _ROLL_PATH_OK = bool(jnp.allclose(got, ref, atol=1e-5, rtol=1e-5))
        except Exception:
            _ROLL_PATH_OK = False
    return _ROLL_PATH_OK


def ssim_sparse(x, y, row_tile=None):
    """SSIM_sparse forward. x, y: (N, C, H, W). Returns (N, C, H, W - 8)."""
    W = x.shape[-1]
    use_roll = (W % 128 == 0) and _roll_path_ok()
    return _ssim_sparse_impl(x, y, row_tile=row_tile, use_roll=use_roll)


if __name__ == "__main__":
    keys = jax.random.split(jax.random.PRNGKey(0), 6)

    # Small NCHW shape matching the module's expectations.
    x = jax.random.uniform(keys[0], (2, 4, 16, 16), dtype=jnp.float32)
    y = jax.random.uniform(keys[1], (2, 4, 16, 16), dtype=jnp.float32)
    out = ssim_sparse(x, y)
    jax.block_until_ready(out)
    assert out.shape == (2, 4, 16, 8)
    assert jnp.allclose(out, _ssim_sparse_ref(x, y), atol=1e-5, rtol=1e-5)

    # Lane-aligned width (exercises the pltpu.roll log-tree path if available).
    x2 = jax.random.uniform(keys[2], (1, 2, 8, 128), dtype=jnp.float32)
    y2 = jax.random.uniform(keys[3], (1, 2, 8, 128), dtype=jnp.float32)
    out2 = ssim_sparse(x2, y2)
    jax.block_until_ready(out2)
    assert out2.shape == (1, 2, 8, 120)
    assert jnp.allclose(out2, _ssim_sparse_ref(x2, y2), atol=1e-5, rtol=1e-5)

    # Row count that is not a multiple of the tile (exercises the padding path).
    x3 = jax.random.uniform(keys[4], (1, 3, 5, 16), dtype=jnp.float32)
    y3 = jax.random.uniform(keys[5], (1, 3, 5, 16), dtype=jnp.float32)
    out3 = ssim_sparse(x3, y3)
    jax.block_until_ready(out3)
    assert out3.shape == (1, 3, 5, 8)
    assert jnp.allclose(out3, _ssim_sparse_ref(x3, y3), atol=1e-5, rtol=1e-5)

    print("KERNEL_OK")
</pallas_src>

<mosaic_0001>
module attributes {stable_mosaic.version = 11 : i64} {
  func.func @_ssim_sparse_kernel(%arg0: i32, %arg1: memref<32x16xf32, #tpu.memory_space<vmem>>, %arg2: memref<32x16xf32, #tpu.memory_space<vmem>>, %arg3: memref<32x8xf32, #tpu.memory_space<vmem>>) attributes {dimension_semantics = [#tpu.dimension_semantics<parallel>], iteration_bounds = array<i64: 4>, scalar_prefetch = 0 : i64, scratch_operands = 0 : i64, tpu.core_type = #tpu.core_type<tc>, window_params = [{transform_indices = @transform_0, window_bounds = array<i64: 32, 16>}, {transform_indices = @transform_1, window_bounds = array<i64: 32, 16>}, {transform_indices = @transform_2, window_bounds = array<i64: 32, 8>}]} {
    %c0 = arith.constant 0 : index
    %c0_0 = arith.constant 0 : index
    %0 = vector.load %arg1[%c0, %c0_0] : memref<32x16xf32, #tpu.memory_space<vmem>>, vector<32x16xf32>
    %c0_1 = arith.constant 0 : index
    %c0_2 = arith.constant 0 : index
    %1 = vector.load %arg2[%c0_1, %c0_2] : memref<32x16xf32, #tpu.memory_space<vmem>>, vector<32x16xf32>
    %2 = vector.extract_strided_slice %0 {offsets = [0, 0], sizes = [32, 15], strides = [1, 1]} : vector<32x16xf32> to vector<32x15xf32>
    %3 = vector.extract_strided_slice %0 {offsets = [0, 1], sizes = [32, 15], strides = [1, 1]} : vector<32x16xf32> to vector<32x15xf32>
    %4 = arith.addf %2, %3 : vector<32x15xf32>
    %5 = vector.extract_strided_slice %4 {offsets = [0, 0], sizes = [32, 13], strides = [1, 1]} : vector<32x15xf32> to vector<32x13xf32>
    %6 = vector.extract_strided_slice %4 {offsets = [0, 2], sizes = [32, 13], strides = [1, 1]} : vector<32x15xf32> to vector<32x13xf32>
    %7 = arith.addf %5, %6 : vector<32x13xf32>
    %8 = vector.extract_strided_slice %7 {offsets = [0, 0], sizes = [32, 9], strides = [1, 1]} : vector<32x13xf32> to vector<32x9xf32>
    %9 = vector.extract_strided_slice %7 {offsets = [0, 4], sizes = [32, 9], strides = [1, 1]} : vector<32x13xf32> to vector<32x9xf32>
    %10 = arith.addf %8, %9 : vector<32x9xf32>
    %11 = vector.extract_strided_slice %10 {offsets = [0, 0], sizes = [32, 8], strides = [1, 1]} : vector<32x9xf32> to vector<32x8xf32>
    %12 = vector.extract_strided_slice %0 {offsets = [0, 8], sizes = [32, 8], strides = [1, 1]} : vector<32x16xf32> to vector<32x8xf32>
    %13 = arith.addf %11, %12 : vector<32x8xf32>
    %14 = vector.extract_strided_slice %1 {offsets = [0, 0], sizes = [32, 15], strides = [1, 1]} : vector<32x16xf32> to vector<32x15xf32>
    %15 = vector.extract_strided_slice %1 {offsets = [0, 1], sizes = [32, 15], strides = [1, 1]} : vector<32x16xf32> to vector<32x15xf32>
    %16 = arith.addf %14, %15 : vector<32x15xf32>
    %17 = vector.extract_strided_slice %16 {offsets = [0, 0], sizes = [32, 13], strides = [1, 1]} : vector<32x15xf32> to vector<32x13xf32>
    %18 = vector.extract_strided_slice %16 {offsets = [0, 2], sizes = [32, 13], strides = [1, 1]} : vector<32x15xf32> to vector<32x13xf32>
    %19 = arith.addf %17, %18 : vector<32x13xf32>
    %20 = vector.extract_strided_slice %19 {offsets = [0, 0], sizes = [32, 9], strides = [1, 1]} : vector<32x13xf32> to vector<32x9xf32>
    %21 = vector.extract_strided_slice %19 {offsets = [0, 4], sizes = [32, 9], strides = [1, 1]} : vector<32x13xf32> to vector<32x9xf32>
    %22 = arith.addf %20, %21 : vector<32x9xf32>
    %23 = vector.extract_strided_slice %22 {offsets = [0, 0], sizes = [32, 8], strides = [1, 1]} : vector<32x9xf32> to vector<32x8xf32>
    %24 = vector.extract_strided_slice %1 {offsets = [0, 8], sizes = [32, 8], strides = [1, 1]} : vector<32x16xf32> to vector<32x8xf32>
    %25 = arith.addf %23, %24 : vector<32x8xf32>
    %26 = arith.mulf %0, %0 : vector<32x16xf32>
    %27 = vector.extract_strided_slice %26 {offsets = [0, 0], sizes = [32, 15], strides = [1, 1]} : vector<32x16xf32> to vector<32x15xf32>
    %28 = vector.extract_strided_slice %26 {offsets = [0, 1], sizes = [32, 15], strides = [1, 1]} : vector<32x16xf32> to vector<32x15xf32>
    %29 = arith.addf %27, %28 : vector<32x15xf32>
    %30 = vector.extract_strided_slice %29 {offsets = [0, 0], sizes = [32, 13], strides = [1, 1]} : vector<32x15xf32> to vector<32x13xf32>
    %31 = vector.extract_strided_slice %29 {offsets = [0, 2], sizes = [32, 13], strides = [1, 1]} : vector<32x15xf32> to vector<32x13xf32>
    %32 = arith.addf %30, %31 : vector<32x13xf32>
    %33 = vector.extract_strided_slice %32 {offsets = [0, 0], sizes = [32, 9], strides = [1, 1]} : vector<32x13xf32> to vector<32x9xf32>
    %34 = vector.extract_strided_slice %32 {offsets = [0, 4], sizes = [32, 9], strides = [1, 1]} : vector<32x13xf32> to vector<32x9xf32>
    %35 = arith.addf %33, %34 : vector<32x9xf32>
    %36 = vector.extract_strided_slice %35 {offsets = [0, 0], sizes = [32, 8], strides = [1, 1]} : vector<32x9xf32> to vector<32x8xf32>
    %37 = vector.extract_strided_slice %26 {offsets = [0, 8], sizes = [32, 8], strides = [1, 1]} : vector<32x16xf32> to vector<32x8xf32>
    %38 = arith.addf %36, %37 : vector<32x8xf32>
    %39 = arith.mulf %1, %1 : vector<32x16xf32>
    %40 = vector.extract_strided_slice %39 {offsets = [0, 0], sizes = [32, 15], strides = [1, 1]} : vector<32x16xf32> to vector<32x15xf32>
    %41 = vector.extract_strided_slice %39 {offsets = [0, 1], sizes = [32, 15], strides = [1, 1]} : vector<32x16xf32> to vector<32x15xf32>
    %42 = arith.addf %40, %41 : vector<32x15xf32>
    %43 = vector.extract_strided_slice %42 {offsets = [0, 0], sizes = [32, 13], strides = [1, 1]} : vector<32x15xf32> to vector<32x13xf32>
    %44 = vector.extract_strided_slice %42 {offsets = [0, 2], sizes = [32, 13], strides = [1, 1]} : vector<32x15xf32> to vector<32x13xf32>
    %45 = arith.addf %43, %44 : vector<32x13xf32>
    %46 = vector.extract_strided_slice %45 {offsets = [0, 0], sizes = [32, 9], strides = [1, 1]} : vector<32x13xf32> to vector<32x9xf32>
    %47 = vector.extract_strided_slice %45 {offsets = [0, 4], sizes = [32, 9], strides = [1, 1]} : vector<32x13xf32> to vector<32x9xf32>
    %48 = arith.addf %46, %47 : vector<32x9xf32>
    %49 = vector.extract_strided_slice %48 {offsets = [0, 0], sizes = [32, 8], strides = [1, 1]} : vector<32x9xf32> to vector<32x8xf32>
    %50 = vector.extract_strided_slice %39 {offsets = [0, 8], sizes = [32, 8], strides = [1, 1]} : vector<32x16xf32> to vector<32x8xf32>
    %51 = arith.addf %49, %50 : vector<32x8xf32>
    %52 = arith.mulf %0, %1 : vector<32x16xf32>
    %53 = vector.extract_strided_slice %52 {offsets = [0, 0], sizes = [32, 15], strides = [1, 1]} : vector<32x16xf32> to vector<32x15xf32>
    %54 = vector.extract_strided_slice %52 {offsets = [0, 1], sizes = [32, 15], strides = [1, 1]} : vector<32x16xf32> to vector<32x15xf32>
    %55 = arith.addf %53, %54 : vector<32x15xf32>
    %56 = vector.extract_strided_slice %55 {offsets = [0, 0], sizes = [32, 13], strides = [1, 1]} : vector<32x15xf32> to vector<32x13xf32>
    %57 = vector.extract_strided_slice %55 {offsets = [0, 2], sizes = [32, 13], strides = [1, 1]} : vector<32x15xf32> to vector<32x13xf32>
    %58 = arith.addf %56, %57 : vector<32x13xf32>
    %59 = vector.extract_strided_slice %58 {offsets = [0, 0], sizes = [32, 9], strides = [1, 1]} : vector<32x13xf32> to vector<32x9xf32>
    %60 = vector.extract_strided_slice %58 {offsets = [0, 4], sizes = [32, 9], strides = [1, 1]} : vector<32x13xf32> to vector<32x9xf32>
    %61 = arith.addf %59, %60 : vector<32x9xf32>
    %62 = vector.extract_strided_slice %61 {offsets = [0, 0], sizes = [32, 8], strides = [1, 1]} : vector<32x9xf32> to vector<32x8xf32>
    %63 = vector.extract_strided_slice %52 {offsets = [0, 8], sizes = [32, 8], strides = [1, 1]} : vector<32x16xf32> to vector<32x8xf32>
    %64 = arith.addf %62, %63 : vector<32x8xf32>
    %65 = arith.mulf %13, %13 : vector<32x8xf32>
    %66 = arith.mulf %25, %25 : vector<32x8xf32>
    %67 = arith.mulf %13, %25 : vector<32x8xf32>
    %cst = arith.constant 2.000000e+00 : f32
    %68 = vector.broadcast %cst : f32 to vector<32x8xf32>
    %69 = arith.mulf %68, %67 : vector<32x8xf32>
    %cst_3 = arith.constant 8.100000e-03 : f32
    %70 = vector.broadcast %cst_3 : f32 to vector<32x8xf32>
    %71 = arith.addf %69, %70 : vector<32x8xf32>
    %cst_4 = arith.constant 1.800000e+01 : f32
    %72 = vector.broadcast %cst_4 : f32 to vector<32x8xf32>
    %73 = arith.mulf %72, %64 : vector<32x8xf32>
    %74 = arith.subf %73, %69 : vector<32x8xf32>
    %cst_5 = arith.constant 7.290000e-02 : f32
    %75 = vector.broadcast %cst_5 : f32 to vector<32x8xf32>
    %76 = arith.addf %74, %75 : vector<32x8xf32>
    %77 = arith.mulf %71, %76 : vector<32x8xf32>
    %78 = arith.addf %65, %66 : vector<32x8xf32>
    %cst_6 = arith.constant 8.100000e-03 : f32
    %79 = vector.broadcast %cst_6 : f32 to vector<32x8xf32>
    %80 = arith.addf %78, %79 : vector<32x8xf32>
    %81 = arith.addf %38, %51 : vector<32x8xf32>
    %cst_7 = arith.constant 9.000000e+00 : f32
    %82 = vector.broadcast %cst_7 : f32 to vector<32x8xf32>
    %83 = arith.mulf %82, %81 : vector<32x8xf32>
    %84 = arith.subf %83, %65 : vector<32x8xf32>
    %85 = arith.subf %84, %66 : vector<32x8xf32>
    %cst_8 = arith.constant 7.290000e-02 : f32
    %86 = vector.broadcast %cst_8 : f32 to vector<32x8xf32>
    %87 = arith.addf %85, %86 : vector<32x8xf32>
    %88 = arith.mulf %80, %87 : vector<32x8xf32>
    %89 = tpu.reciprocal %88 {approx = true} : vector<32x8xf32> -> vector<32x8xf32>
    %90 = arith.mulf %88, %89 : vector<32x8xf32>
    %cst_9 = arith.constant 2.000000e+00 : f32
    %91 = vector.broadcast %cst_9 : f32 to vector<32x8xf32>
    %92 = arith.subf %91, %90 : vector<32x8xf32>
    %93 = arith.mulf %89, %92 : vector<32x8xf32>
    %94 = arith.mulf %77, %93 : vector<32x8xf32>
    %cst_10 = arith.constant 1.000000e+00 : f32
    %95 = vector.broadcast %cst_10 : f32 to vector<32x8xf32>
    %96 = arith.subf %95, %94 : vector<32x8xf32>
    %cst_11 = arith.constant 5.000000e-01 : f32
    %97 = vector.broadcast %cst_11 : f32 to vector<32x8xf32>
    %98 = arith.mulf %96, %97 : vector<32x8xf32>
    %cst_12 = arith.constant 0.000000e+00 : f32
    %cst_13 = arith.constant 1.000000e+00 : f32
    %99 = vector.broadcast %cst_12 : f32 to vector<32x8xf32>
    %100 = arith.maximumf %99, %98 : vector<32x8xf32>
    %101 = vector.broadcast %cst_13 : f32 to vector<32x8xf32>
    %102 = arith.minimumf %101, %100 : vector<32x8xf32>
    %c0_14 = arith.constant 0 : index
    %c0_15 = arith.constant 0 : index
    %103 = vector.load %arg3[%c0_14, %c0_15] : memref<32x8xf32, #tpu.memory_space<vmem>>, vector<32x8xf32>
    tpu.vector_store %arg3[%c0_14, %c0_15], %102 {strides = array<i32>} : memref<32x8xf32, #tpu.memory_space<vmem>>, vector<32x8xf32>,
    return
  }
  func.func @transform_0(%arg0: i32) -> (i32, i32) {
    %c0_i32 = arith.constant 0 : i32
    %c0_i32_0 = arith.constant 0 : i32
    return %arg0, %c0_i32 : i32, i32
  }
  func.func @transform_1(%arg0: i32) -> (i32, i32) {
    %c0_i32 = arith.constant 0 : i32
    %c0_i32_0 = arith.constant 0 : i32
    return %arg0, %c0_i32 : i32, i32
  }
  func.func @transform_2(%arg0: i32) -> (i32, i32) {
    %c0_i32 = arith.constant 0 : i32
    %c0_i32_0 = arith.constant 0 : i32
    return %arg0, %c0_i32 : i32, i32
  }
}

</mosaic_0001>

<llo_original>
// kernel: tpu_custom_call.1
$region0: #{tpu_custom_call.1}
  #allocation0 [shape = 'u32[]', space=smem, size = 0x4, offset = 0x4, fixed_abs, tag = 'smem constant byte address 0x4 - core index']
  #allocation1 [shape = 'u32[72,128]{1,0:T(1,128)}', space=vmem, size = 0x9000, scoped, tag = 'internal scratch']
  %s0 = inlined_call_operand.vmem [shape: f32[128,16], index: 0, kind: input, shape index: {}]
  %s1 = inlined_call_operand.vmem [shape: f32[128,16], index: 1, kind: input, shape index: {}]
  %s2 = inlined_call_operand.vmem [shape: f32[128,8], index: 2, kind: output, shape index: {}]
  %s3 = sld [smem:[#allocation0]]
  $region41: #{tpu_custom_call.1} parent=0
    _
  %s5 = ssub.s32 1, %s3
  %s6 = scalar_select 0, %s5, %s3
  loop: start=0, step=1, limit=6
  $region2: #{tpu_custom_call.1} parent=0 // loop_pre_header
    _
  $region3: #{tpu_custom_call.1} parent=0 // loop_header
    %s8 = sphi 0, %s12
    %p9 = scmp.ge.s32.totalorder %s8, 6
    %s18 = sphi 0, %s20
    %s21 = sphi 0, %s18
    %s22 = sphi 0, %s21
    %s38 = sphi 0, %s22
    %s44 = sphi 0, %s46
    %s47 = sphi 0, %s44
    %s48 = sphi 0, %s47
    %s64 = sphi 0, %s48
    %s70 = sphi 0, %s72
    %s73 = sphi 0, %s70
    %s74 = sphi 0, %s73
    %s90 = sphi 0, %s74
  $region4: #{tpu_custom_call.1} parent=0 // loop_header_branch
    %11 = sbr.rel (%p9) target = $region8
  $region5: #{tpu_custom_call.1} parent=0 // loop_body
    %s13 = ssub.s32 %s8, 1
    %s14 = ssub.s32 %s8, 2
    %s15 = sadd.s32 %s8, 1
    %s16 = ssub.s32 %s8, %s15
    %p17 = scmp.eq.s32.totalorder %s16, 0
    %s19 = sadd.s32 %s18, 1
    %s20 = scalar_select %p17, %s18, %s19
    %p23 = pneg %p17
    %p24 = scmp.eq.s32.totalorder %s8, 3
    %p25 = por %p23, %p24
    %p26 = scmp.ne.s32.totalorder %s18, %s21
    %p27 = scmp.eq.s32.totalorder %s8, 0
    %p28 = por %p26, %p27
    %p29 = scmp.ne.s32.totalorder %s18, %s21
    %p30 = scmp.eq.s32.totalorder %s13, 3
    %p31 = por %p29, %p30
    %p32 = scmp.ne.s32.totalorder %s21, %s22
    %p33 = scmp.eq.s32.totalorder %s13, 0
    %p34 = por %p32, %p33
    %p35 = scmp.ne.s32.totalorder %s21, %s22
    %p36 = scmp.eq.s32.totalorder %s14, 3
    %p37 = por %p35, %p36
    %p39 = scmp.ne.s32.totalorder %s22, %s38
    %p40 = scmp.eq.s32.totalorder %s14, 0
    %p41 = por %p39, %p40
    %s42 = ssub.s32 %s8, %s15
    %p43 = scmp.eq.s32.totalorder %s42, 0
    %s45 = sadd.s32 %s44, 1
    %s46 = scalar_select %p43, %s44, %s45
    %p49 = pneg %p43
    %p50 = scmp.eq.s32.totalorder %s8, 3
    %p51 = por %p49, %p50
    %p52 = scmp.ne.s32.totalorder %s44, %s47
    %p53 = scmp.eq.s32.totalorder %s8, 0
    %p54 = por %p52, %p53
    %p55 = scmp.ne.s32.totalorder %s44, %s47
    %p56 = scmp.eq.s32.totalorder %s13, 3
    %p57 = por %p55, %p56
    %p58 = scmp.ne.s32.totalorder %s47, %s48
    %p59 = scmp.eq.s32.totalorder %s13, 0
    %p60 = por %p58, %p59
    %p61 = scmp.ne.s32.totalorder %s47, %s48
    %p62 = scmp.eq.s32.totalorder %s14, 3
    %p63 = por %p61, %p62
    %p65 = scmp.ne.s32.totalorder %s48, %s64
    %p66 = scmp.eq.s32.totalorder %s14, 0
    %p67 = por %p65, %p66
    %s68 = ssub.s32 %s8, %s15
    %p69 = scmp.eq.s32.totalorder %s68, 0
    %s71 = sadd.s32 %s70, 1
    %s72 = scalar_select %p69, %s70, %s71
    %p75 = pneg %p69
    %p76 = scmp.eq.s32.totalorder %s8, 3
    %p77 = por %p75, %p76
    %p78 = scmp.ne.s32.totalorder %s70, %s73
    %p79 = scmp.eq.s32.totalorder %s8, 0
    %p80 = por %p78, %p79
    %p81 = scmp.ne.s32.totalorder %s70, %s73
    %p82 = scmp.eq.s32.totalorder %s13, 3
    %p83 = por %p81, %p82
    %p84 = scmp.ne.s32.totalorder %s73, %s74
    %p85 = scmp.eq.s32.totalorder %s13, 0
    %p86 = por %p84, %p85
    %p87 = scmp.ne.s32.totalorder %s73, %s74
    %p88 = scmp.eq.s32.totalorder %s14, 3
    %p89 = por %p87, %p88
    %p91 = scmp.ne.s32.totalorder %s74, %s90
    %p92 = scmp.eq.s32.totalorder %s14, 0
    %p93 = por %p91, %p92
    %p94 = scmp.le.s32.totalorder 1, %s8
    %p95 = scmp.lt.s32.totalorder %s8, 5
    %p96 = pnand %p94, %p95
    %p97 = pneg %p96
    // Predicated region
    $region9: #{tpu_custom_call.1} parent=5 // pred_check
      _
    $region10: #{tpu_custom_call.1} parent=5 // pred_check_branch
      %99 = sbr.rel (%p96) target = $region12
    $region11: #{tpu_custom_call.1} parent=5 // pred_region
      %s100 = ssub.s32 %s8, 1
    $region12: #{tpu_custom_call.1} parent=5 // pred_fallthru
      _
    %p101 = scmp.lt.s32.totalorder %s8, 4
    // Predicated region
    $region13: #{tpu_custom_call.1} parent=5 // pred_check
      %p102 = pneg %p101
    $region14: #{tpu_custom_call.1} parent=5 // pred_check_branch
      %104 = sbr.rel (%p102) target = $region16
    $region15: #{tpu_custom_call.1} parent=5 // pred_region
      // Predicated region
      $region17: #{tpu_custom_call.1} parent=15 // pred_check
        %p105 = pneg %p28
      $region18: #{tpu_custom_call.1} parent=15 // pred_check_branch
        %107 = sbr.rel (%p105) target = $region20
      $region19: #{tpu_custom_call.1} parent=15 // pred_region
        %s108 = smul.u32 4, %s8
        %p109 = scmp.lt.s32.totalorder %s108, 15
        %s110 = scalar_select %p109, %s108, 15
        %s111 = smul.addr %s110, 8
        %s112 = scalar_lea.vmem %s0, %s111
        %s113 = smul.u32 4, %s8
      $region20: #{tpu_custom_call.1} parent=15 // pred_fallthru
        _
      // Predicated region
      $region21: #{tpu_custom_call.1} parent=15 // pred_check
        %p114 = pneg %p54
      $region22: #{tpu_custom_call.1} parent=15 // pred_check_branch
        %116 = sbr.rel (%p114) target = $region24
      $region23: #{tpu_custom_call.1} parent=15 // pred_region
        %s117 = smul.u32 4, %s8
        %p118 = scmp.lt.s32.totalorder %s117, 15
        %s119 = scalar_select %p118, %s117, 15
        %s120 = smul.addr %s119, 8
        %s121 = scalar_lea.vmem %s1, %s120
        %s122 = smul.u32 4, %s8
      $region24: #{tpu_custom_call.1} parent=15 // pred_fallthru
        _
    $region16: #{tpu_custom_call.1} parent=5 // pred_fallthru
      _
    %p123 = scmp.le.s32.totalorder 1, %s8
    %p124 = scmp.lt.s32.totalorder %s8, 5
    %p125 = pnand %p123, %p124
    %p126 = pneg %p125
    // Predicated region
    $region25: #{tpu_custom_call.1} parent=5 // pred_check
      _
    $region26: #{tpu_custom_call.1} parent=5 // pred_check_branch
      %128 = sbr.rel (%p125) target = $region28
    $region27: #{tpu_custom_call.1} parent=5 // pred_region
      %s129 = ssub.s32 %s8, 1
      %s130 = smul.u32 4, %s13
      %p131 = scmp.lt.s32.totalorder %s130, 15
      %s132 = scalar_select %p131, %s130, 15
      %s133 = smul.addr %s132, 8
      %s134 = scalar_lea.vmem %s0, %s133
      %p135 = pneg %p34
      %p136 = pneg %p31
      %s137 = smul.u32 4, %s13
      %p138 = scmp.lt.s32.totalorder %s137, 15
      %s139 = scalar_select %p138, %s137, 15
      %s140 = smul.addr %s139, 8
      %s141 = scalar_lea.vmem %s1, %s140
      %p142 = pneg %p60
      %p143 = pneg %p57
      %p144 = pneg %p86
      %p145 = pneg %p83
      %s146 = smul.u32 4, %s13
      %p147 = scmp.lt.s32.totalorder %s146, 15
      %s148 = scalar_select %p147, %s146, 15
      %s149 = smul.addr %s148, 8
      %s150 = scalar_lea.vmem %s2, %s149
      %s151 = smul.u32 4, %s13
      %p152 = scmp.lt.s32.totalorder %s151, 15
      %s153 = scalar_select %p152, %s151, 15
      %s154 = smul.addr %s153, 8
      %s155 = scalar_lea.vmem %s0, %s154
      %s156 = smul.u32 4, %s13
      %s157 = smul.u32 4, %s13
      %p158 = scmp.lt.s32.totalorder %s157, 15
      %s159 = scalar_select %p158, %s157, 15
      %s160 = smul.addr %s159, 8
      %s161 = scalar_lea.vmem %s1, %s160
      %s162 = smul.u32 4, %s13
      %s163 = smul.u32 4, %s13
      %p164 = scmp.lt.s32.totalorder %s163, 15
      %s165 = scalar_select %p164, %s163, 15
      %s166 = smul.addr %s165, 8
      %s167 = scalar_lea.vmem %s2, %s166
      %s168 = smul.u32 4, %s13
      %v169 = vld [vmem:[%s155] sm:$0xff]
      %v170 = vld [vmem:[%s155 + $0x8] sm:$0xff]
      %v171 = vld [vmem:[%s155 + $0x10] sm:$0xff]
      %v172 = vld [vmem:[%s155 + $0x18] sm:$0xff]
      %v173 = vld [vmem:[%s161] sm:$0xff]
      %v174 = vld [vmem:[%s161 + $0x8] sm:$0xff]
      %v175 = vld [vmem:[%s161 + $0x10] sm:$0xff]
      %v176 = vld [vmem:[%s161 + $0x18] sm:$0xff]
      %181 = vrot.lane.b32.xlu0 %v169, 127
      %v182 = vpop.permute.xlu0 %181
      %183 = vrot.lane.b32.xlu0 %v170, 127
      %v184 = vpop.permute.xlu0 %183
      %185 = vrot.lane.b32.xlu0 %v171, 127
      %v186 = vpop.permute.xlu0 %185
      %187 = vrot.lane.b32.xlu0 %v172, 127
      %v188 = vpop.permute.xlu0 %187
      %v193 = vadd.f32 %v169, %v182
      %v194 = vadd.f32 %v170, %v184
      %v195 = vadd.f32 %v171, %v186
      %v196 = vadd.f32 %v172, %v188
      %201 = vrot.lane.b32.xlu0 %v193, 126
      %v202 = vpop.permute.xlu0 %201
      %203 = vrot.lane.b32.xlu0 %v194, 126
      %v204 = vpop.permute.xlu0 %203
      %205 = vrot.lane.b32.xlu0 %v195, 126
      %v206 = vpop.permute.xlu0 %205
      %207 = vrot.lane.b32.xlu0 %v196, 126
      %v208 = vpop.permute.xlu0 %207
      %v213 = vadd.f32 %v193, %v202
      %v214 = vadd.f32 %v194, %v204
      %v215 = vadd.f32 %v195, %v206
      %v216 = vadd.f32 %v196, %v208
      %221 = vrot.lane.b32.xlu0 %v213, 124
      %v222 = vpop.permute.xlu0 %221
      %223 = vrot.lane.b32.xlu0 %v214, 124
      %v224 = vpop.permute.xlu0 %223
      %225 = vrot.lane.b32.xlu0 %v215, 124
      %v226 = vpop.permute.xlu0 %225
      %227 = vrot.lane.b32.xlu0 %v216, 124
      %v228 = vpop.permute.xlu0 %227
      %v233 = vadd.f32 %v213, %v222
      %v234 = vadd.f32 %v214, %v224
      %v235 = vadd.f32 %v215, %v226
      %v236 = vadd.f32 %v216, %v228
      %237 = vrot.lane.b32.xlu0 %v169, 120
      %v238 = vpop.permute.xlu0 %237
      %239 = vrot.lane.b32.xlu0 %v170, 120
      %v240 = vpop.permute.xlu0 %239
      %241 = vrot.lane.b32.xlu0 %v171, 120
      %v242 = vpop.permute.xlu0 %241
      %243 = vrot.lane.b32.xlu0 %v172, 120
      %v244 = vpop.permute.xlu0 %243
      %v249 = vadd.f32 %v233, %v238
      %v250 = vadd.f32 %v234, %v240
      %v251 = vadd.f32 %v235, %v242
      %v252 = vadd.f32 %v236, %v244
      %257 = vrot.lane.b32.xlu0 %v173, 127
      %v258 = vpop.permute.xlu0 %257
      %259 = vrot.lane.b32.xlu0 %v174, 127
      %v260 = vpop.permute.xlu0 %259
      %261 = vrot.lane.b32.xlu0 %v175, 127
      %v262 = vpop.permute.xlu0 %261
      %263 = vrot.lane.b32.xlu0 %v176, 127
      %v264 = vpop.permute.xlu0 %263
      %v269 = vadd.f32 %v173, %v258
      %v270 = vadd.f32 %v174, %v260
      %v271 = vadd.f32 %v175, %v262
      %v272 = vadd.f32 %v176, %v264
      %277 = vrot.lane.b32.xlu0 %v269, 126
      %v278 = vpop.permute.xlu0 %277
      %279 = vrot.lane.b32.xlu0 %v270, 126
      %v280 = vpop.permute.xlu0 %279
      %281 = vrot.lane.b32.xlu0 %v271, 126
      %v282 = vpop.permute.xlu0 %281
      %283 = vrot.lane.b32.xlu0 %v272, 126
      %v284 = vpop.permute.xlu0 %283
      %v289 = vadd.f32 %v269, %v278
      %v290 = vadd.f32 %v270, %v280
      %v291 = vadd.f32 %v271, %v282
      %v292 = vadd.f32 %v272, %v284
      %297 = vrot.lane.b32.xlu0 %v289, 124
      %v298 = vpop.permute.xlu0 %297
      %299 = vrot.lane.b32.xlu0 %v290, 124
      %v300 = vpop.permute.xlu0 %299
      %301 = vrot.lane.b32.xlu0 %v291, 124
      %v302 = vpop.permute.xlu0 %301
      %303 = vrot.lane.b32.xlu0 %v292, 124
      %v304 = vpop.permute.xlu0 %303
      %v309 = vadd.f32 %v289, %v298
      %v310 = vadd.f32 %v290, %v300
      %v311 = vadd.f32 %v291, %v302
      %v312 = vadd.f32 %v292, %v304
      %313 = vrot.lane.b32.xlu0 %v173, 120
      %v314 = vpop.permute.xlu0 %313
      %315 = vrot.lane.b32.xlu0 %v174, 120
      %v316 = vpop.permute.xlu0 %315
      %317 = vrot.lane.b32.xlu0 %v175, 120
      %v318 = vpop.permute.xlu0 %317
      %319 = vrot.lane.b32.xlu0 %v176, 120
      %v320 = vpop.permute.xlu0 %319
      %v325 = vadd.f32 %v309, %v314
      %v326 = vadd.f32 %v310, %v316
      %v327 = vadd.f32 %v311, %v318
      %v328 = vadd.f32 %v312, %v320
      %v329 = vmul.f32 %v169, %v169
      %v330 = vmul.f32 %v170, %v170
      %v331 = vmul.f32 %v171, %v171
      %v332 = vmul.f32 %v172, %v172
      %337 = vrot.lane.b32.xlu0 %v329, 127
      %v338 = vpop.permute.xlu0 %337
      %339 = vrot.lane.b32.xlu0 %v330, 127
      %v340 = vpop.permute.xlu0 %339
      %341 = vrot.lane.b32.xlu0 %v331, 127
      %v342 = vpop.permute.xlu0 %341
      %343 = vrot.lane.b32.xlu0 %v332, 127
      %v344 = vpop.permute.xlu0 %343
      %v349 = vadd.f32 %v329, %v338
      %v350 = vadd.f32 %v330, %v340
      %v351 = vadd.f32 %v331, %v342
      %v352 = vadd.f32 %v332, %v344
      %357 = vrot.lane.b32.xlu0 %v349, 126
      %v358 = vpop.permute.xlu0 %357
      %359 = vrot.lane.b32.xlu0 %v350, 126
      %v360 = vpop.permute.xlu0 %359
      %361 = vrot.lane.b32.xlu0 %v351, 126
      %v362 = vpop.permute.xlu0 %361
      %363 = vrot.lane.b32.xlu0 %v352, 126
      %v364 = vpop.permute.xlu0 %363
      %v369 = vadd.f32 %v349, %v358
      %v370 = vadd.f32 %v350, %v360
      %v371 = vadd.f32 %v351, %v362
      %v372 = vadd.f32 %v352, %v364
      %377 = vrot.lane.b32.xlu0 %v369, 124
      %v378 = vpop.permute.xlu0 %377
      %379 = vrot.lane.b32.xlu0 %v370, 124
      %v380 = vpop.permute.xlu0 %379
      %381 = vrot.lane.b32.xlu0 %v371, 124
      %v382 = vpop.permute.xlu0 %381
      %383 = vrot.lane.b32.xlu0 %v372, 124
      %v384 = vpop.permute.xlu0 %383
      %v389 = vadd.f32 %v369, %v378
      %v390 = vadd.f32 %v370, %v380
      %v391 = vadd.f32 %v371, %v382
      %v392 = vadd.f32 %v372, %v384
      %393 = vrot.lane.b32.xlu0 %v329, 120
      %v394 = vpop.permute.xlu0 %393
      %395 = vrot.lane.b32.xlu0 %v330, 120
      %v396 = vpop.permute.xlu0 %395
      %397 = vrot.lane.b32.xlu0 %v331, 120
      %v398 = vpop.permute.xlu0 %397
      %399 = vrot.lane.b32.xlu0 %v332, 120
      %v400 = vpop.permute.xlu0 %399
      %v405 = vadd.f32 %v389, %v394
      %v406 = vadd.f32 %v390, %v396
      %v407 = vadd.f32 %v391, %v398
      %v408 = vadd.f32 %v392, %v400
      %v409 = vmul.f32 %v173, %v173
      %v410 = vmul.f32 %v174, %v174
      %v411 = vmul.f32 %v175, %v175
      %v412 = vmul.f32 %v176, %v176
      %417 = vrot.lane.b32.xlu0 %v409, 127
      %v418 = vpop.permute.xlu0 %417
      %419 = vrot.lane.b32.xlu0 %v410, 127
      %v420 = vpop.permute.xlu0 %419
      %421 = vrot.lane.b32.xlu0 %v411, 127
      %v422 = vpop.permute.xlu0 %421
      %423 = vrot.lane.b32.xlu0 %v412, 127
      %v424 = vpop.permute.xlu0 %423
      %v429 = vadd.f32 %v409, %v418
      %v430 = vadd.f32 %v410, %v420
      %v431 = vadd.f32 %v411, %v422
      %v432 = vadd.f32 %v412, %v424
      %437 = vrot.lane.b32.xlu0 %v429, 126
      %v438 = vpop.permute.xlu0 %437
      %439 = vrot.lane.b32.xlu0 %v430, 126
      %v440 = vpop.permute.xlu0 %439
      %441 = vrot.lane.b32.xlu0 %v431, 126
      %v442 = vpop.permute.xlu0 %441
      %443 = vrot.lane.b32.xlu0 %v432, 126
      %v444 = vpop.permute.xlu0 %443
      %v449 = vadd.f32 %v429, %v438
      %v450 = vadd.f32 %v430, %v440
      %v451 = vadd.f32 %v431, %v442
      %v452 = vadd.f32 %v432, %v444
      %457 = vrot.lane.b32.xlu0 %v449, 124
      %v458 = vpop.permute.xlu0 %457
      %459 = vrot.lane.b32.xlu0 %v450, 124
      %v460 = vpop.permute.xlu0 %459
      %461 = vrot.lane.b32.xlu0 %v451, 124
      %v462 = vpop.permute.xlu0 %461
      %463 = vrot.lane.b32.xlu0 %v452, 124
      %v464 = vpop.permute.xlu0 %463
      %v469 = vadd.f32 %v449, %v458
      %v470 = vadd.f32 %v450, %v460
      %v471 = vadd.f32 %v451, %v462
      %v472 = vadd.f32 %v452, %v464
      %473 = vrot.lane.b32.xlu0 %v409, 120
      %v474 = vpop.permute.xlu0 %473
      %475 = vrot.lane.b32.xlu0 %v410, 120
      %v476 = vpop.permute.xlu0 %475
      %477 = vrot.lane.b32.xlu0 %v411, 120
      %v478 = vpop.permute.xlu0 %477
      %479 = vrot.lane.b32.xlu0 %v412, 120
      %v480 = vpop.permute.xlu0 %479
      %v485 = vadd.f32 %v469, %v474
      %v486 = vadd.f32 %v470, %v476
      %v487 = vadd.f32 %v471, %v478
      %v488 = vadd.f32 %v472, %v480
      %v489 = vmul.f32 %v169, %v173
      %v490 = vmul.f32 %v170, %v174
      %v491 = vmul.f32 %v171, %v175
      %v492 = vmul.f32 %v172, %v176
      %497 = vrot.lane.b32.xlu0 %v489, 127
      %v498 = vpop.permute.xlu0 %497
      %499 = vrot.lane.b32.xlu0 %v490, 127
      %v500 = vpop.permute.xlu0 %499
      %501 = vrot.lane.b32.xlu0 %v491, 127
      %v502 = vpop.permute.xlu0 %501
      %503 = vrot.lane.b32.xlu0 %v492, 127
      %v504 = vpop.permute.xlu0 %503
      %v509 = vadd.f32 %v489, %v498
      %v510 = vadd.f32 %v490, %v500
      %v511 = vadd.f32 %v491, %v502
      %v512 = vadd.f32 %v492, %v504
      %517 = vrot.lane.b32.xlu0 %v509, 126
      %v518 = vpop.permute.xlu0 %517
      %519 = vrot.lane.b32.xlu0 %v510, 126
      %v520 = vpop.permute.xlu0 %519
      %521 = vrot.lane.b32.xlu0 %v511, 126
      %v522 = vpop.permute.xlu0 %521
      %523 = vrot.lane.b32.xlu0 %v512, 126
      %v524 = vpop.permute.xlu0 %523
      %v529 = vadd.f32 %v509, %v518
      %v530 = vadd.f32 %v510, %v520
      %v531 = vadd.f32 %v511, %v522
      %v532 = vadd.f32 %v512, %v524
      %537 = vrot.lane.b32.xlu0 %v529, 124
      %v538 = vpop.permute.xlu0 %537
      %539 = vrot.lane.b32.xlu0 %v530, 124
      %v540 = vpop.permute.xlu0 %539
      %541 = vrot.lane.b32.xlu0 %v531, 124
      %v542 = vpop.permute.xlu0 %541
      %543 = vrot.lane.b32.xlu0 %v532, 124
      %v544 = vpop.permute.xlu0 %543
      %v549 = vadd.f32 %v529, %v538
      %v550 = vadd.f32 %v530, %v540
      %v551 = vadd.f32 %v531, %v542
      %v552 = vadd.f32 %v532, %v544
      %553 = vrot.lane.b32.xlu0 %v489, 120
      %v554 = vpop.permute.xlu0 %553
      %555 = vrot.lane.b32.xlu0 %v490, 120
      %v556 = vpop.permute.xlu0 %555
      %557 = vrot.lane.b32.xlu0 %v491, 120
      %v558 = vpop.permute.xlu0 %557
      %559 = vrot.lane.b32.xlu0 %v492, 120
      %v560 = vpop.permute.xlu0 %559
      %v565 = vadd.f32 %v549, %v554
      %v566 = vadd.f32 %v550, %v556
      %v567 = vadd.f32 %v551, %v558
      %v568 = vadd.f32 %v552, %v560
      %v569 = vmul.f32 %v249, %v249
      %v570 = vmul.f32 %v250, %v250
      %v571 = vmul.f32 %v251, %v251
      %v572 = vmul.f32 %v252, %v252
      %v573 = vmul.f32 %v325, %v325
      %v574 = vmul.f32 %v326, %v326
      %v575 = vmul.f32 %v327, %v327
      %v576 = vmul.f32 %v328, %v328
      %v577 = vmul.f32 %v249, %v325
      %v578 = vmul.f32 %v250, %v326
      %v579 = vmul.f32 %v251, %v327
      %v580 = vmul.f32 %v252, %v328
      %v581 = vmul.f32 %v577, 2.0
      %v582 = vmul.f32 %v578, 2.0
      %v583 = vmul.f32 %v579, 2.0
      %v584 = vmul.f32 %v580, 2.0
      %v585 = vadd.f32 %v581, 0.0081
      %v586 = vadd.f32 %v582, 0.0081
      %v587 = vadd.f32 %v583, 0.0081
      %v588 = vadd.f32 %v584, 0.0081
      %v589 = vmul.f32 %v565, 18.0
      %v590 = vmul.f32 %v566, 18.0
      %v591 = vmul.f32 %v567, 18.0
      %v592 = vmul.f32 %v568, 18.0
      %v593 = vsub.f32 %v589, %v581
      %v594 = vsub.f32 %v590, %v582
      %v595 = vsub.f32 %v591, %v583
      %v596 = vsub.f32 %v592, %v584
      %v597 = vadd.f32 %v593, 0.0729
      %v598 = vadd.f32 %v594, 0.0729
      %v599 = vadd.f32 %v595, 0.0729
      %v600 = vadd.f32 %v596, 0.0729
      %v601 = vmul.f32 %v585, %v597
      %v602 = vmul.f32 %v586, %v598
      %v603 = vmul.f32 %v587, %v599
      %v604 = vmul.f32 %v588, %v600
      %v605 = vadd.f32 %v569, %v573
      %v606 = vadd.f32 %v570, %v574
      %v607 = vadd.f32 %v571, %v575
      %v608 = vadd.f32 %v572, %v576
      %v609 = vadd.f32 %v605, 0.0081
      %v610 = vadd.f32 %v606, 0.0081
      %v611 = vadd.f32 %v607, 0.0081
      %v612 = vadd.f32 %v608, 0.0081
      %v613 = vadd.f32 %v405, %v485
      %v614 = vadd.f32 %v406, %v486
      %v615 = vadd.f32 %v407, %v487
      %v616 = vadd.f32 %v408, %v488
      %v617 = vmul.f32 %v613, 9.0
      %v618 = vmul.f32 %v614, 9.0
      %v619 = vmul.f32 %v615, 9.0
      %v620 = vmul.f32 %v616, 9.0
      %v621 = vsub.f32 %v617, %v569
      %v622 = vsub.f32 %v618, %v570
      %v623 = vsub.f32 %v619, %v571
      %v624 = vsub.f32 %v620, %v572
      %v625 = vsub.f32 %v621, %v573
      %v626 = vsub.f32 %v622, %v574
      %v627 = vsub.f32 %v623, %v575
      %v628 = vsub.f32 %v624, %v576
      %v629 = vadd.f32 %v625, 0.0729
      %v630 = vadd.f32 %v626, 0.0729
      %v631 = vadd.f32 %v627, 0.0729
      %v632 = vadd.f32 %v628, 0.0729
      %v633 = vmul.f32 %v609, %v629
      %v634 = vmul.f32 %v610, %v630
      %v635 = vmul.f32 %v611, %v631
      %v636 = vmul.f32 %v612, %v632
      %v637 = vrcp.pop %v633
      %v638 = vrcp.pop %v634
      %v639 = vrcp.pop %v635
      %v640 = vrcp.pop %v636
      %v641 = vmul.f32 %v633, %v637
      %v642 = vmul.f32 %v634, %v638
      %v643 = vmul.f32 %v635, %v639
      %v644 = vmul.f32 %v636, %v640
      %v645 = vsub.f32 2.0, %v641
      %v646 = vsub.f32 2.0, %v642
      %v647 = vsub.f32 2.0, %v643
      %v648 = vsub.f32 2.0, %v644
      %v649 = vmul.f32 %v637, %v645
      %v650 = vmul.f32 %v638, %v646
      %v651 = vmul.f32 %v639, %v647
      %v652 = vmul.f32 %v640, %v648
      %v653 = vmul.f32 %v601, %v649
      %v654 = vmul.f32 %v602, %v650
      %v655 = vmul.f32 %v603, %v651
      %v656 = vmul.f32 %v604, %v652
      %v657 = vsub.f32 1.0, %v653
      %v658 = vsub.f32 1.0, %v654
      %v659 = vsub.f32 1.0, %v655
      %v660 = vsub.f32 1.0, %v656
      %v661 = vmul.f32 %v657, 0.5
      %v662 = vmul.f32 %v658, 0.5
      %v663 = vmul.f32 %v659, 0.5
      %v664 = vmul.f32 %v660, 0.5
      %v665 = vmax.f32 %v661, 0.0
      %v666 = vmax.f32 %v662, 0.0
      %v667 = vmax.f32 %v663, 0.0
      %v668 = vmax.f32 %v664, 0.0
      %v669 = vmin.f32 %v665, 1.0
      %v670 = vmin.f32 %v666, 1.0
      %v671 = vmin.f32 %v667, 1.0
      %v672 = vmin.f32 %v668, 1.0
      %vm673 = vcmask 64512
      %674 = vst.msk [vmem:[%s167] sm:$0xff] %vm673, %v669
      %675 = vst.msk [vmem:[%s167 + $0x8] sm:$0xff] %vm673, %v670
      %676 = vst.msk [vmem:[%s167 + $0x10] sm:$0xff] %vm673, %v671
      %677 = vst.msk [vmem:[%s167 + $0x18] sm:$0xff] %vm673, %v672
      %s678 = smul.u32 4, %s13
      %p679 = scmp.lt.s32.totalorder %s678, 15
      %s680 = scalar_select %p679, %s678, 15
      %s681 = smul.addr %s680, 8
      %s682 = scalar_lea.vmem %s2, %s681
      // Predicated region
      $region29: #{tpu_custom_call.1} parent=27 // pred_check
        %p683 = pneg %p83
      $region30: #{tpu_custom_call.1} parent=27 // pred_check_branch
        %685 = sbr.rel (%p683) target = $region32
      $region31: #{tpu_custom_call.1} parent=27 // pred_region
        %s686 = smul.u32 4, %s13
      $region32: #{tpu_custom_call.1} parent=27 // pred_fallthru
        _
    $region28: #{tpu_custom_call.1} parent=5 // pred_fallthru
      _
    %p687 = scmp.le.s32.totalorder 2, %s8
    // Predicated region
    $region33: #{tpu_custom_call.1} parent=5 // pred_check
      %p688 = pneg %p687
    $region34: #{tpu_custom_call.1} parent=5 // pred_check_branch
      %690 = sbr.rel (%p688) target = $region36
    $region35: #{tpu_custom_call.1} parent=5 // pred_region
      %s691 = ssub.s32 %s8, 2
      // Predicated region
      $region37: #{tpu_custom_call.1} parent=35 // pred_check
        %p692 = pneg %p89
      $region38: #{tpu_custom_call.1} parent=35 // pred_check_branch
        %694 = sbr.rel (%p692) target = $region40
      $region39: #{tpu_custom_call.1} parent=35 // pred_region
        %s695 = smul.u32 4, %s14
        %p696 = scmp.lt.s32.totalorder %s695, 15
        %s697 = scalar_select %p696, %s695, 15
        %s698 = smul.addr %s697, 8
        %s699 = scalar_lea.vmem %s2, %s698
      $region40: #{tpu_custom_call.1} parent=35 // pred_fallthru
        _
    $region36: #{tpu_custom_call.1} parent=5 // pred_fallthru
      _
  $region6: #{tpu_custom_call.1} parent=0 // loop_footer
    %s12 = sadd.s32 1, %s8
  $region7: #{tpu_custom_call.1} parent=0 // loop_footer_branch
    %7 = sbr.rel target = $region3
  $region8: #{tpu_custom_call.1} parent=0 // loop_exit
    _

</llo_original>
